<compile_context>
chip_gen: v7x
topology: tpu7x:2x2x1
jax: 0.10.0
libtpu: 0.0.40
codegen_flags: <defaults>
</compile_context>

<pallas_src>
import functools

import numpy as np

import jax
import jax.numpy as jnp
from jax.experimental import pallas as pl
from jax.experimental.pallas import tpu as pltpu


# ----------------------------------------------------------------------------
# Pallas kernel: ONE invocation runs the whole tree.
#   phase 1: batched leaf pass (vectorized over all leaves)
#   phase 2: fori_loop over tree LEVELS; each level is a dense batch
# ----------------------------------------------------------------------------
def _tree_gru_kernel(left_ref, right_ref,              # SMEM scalar prefetch: (D*T,) padded child rows
                     grzx_ref, whl_ref, whr_ref, wg_ref,   # VMEM inputs
                     h_ref,                             # VMEM output (L + D*T + 1, Mp)
                     childl_ref, childr_ref,            # VMEM scratch (T, Mp) each
                     *, mem_pad, num_leaves, num_levels, level_tile):
    Mp = mem_pad
    L = num_leaves
    D = num_levels
    T = level_tile
    Z = L + D * T            # permanent zero-state row (missing child / level padding)

    # Zero row must be valid before any gather can read it.
    h_ref[pl.ds(Z, 1), :] = jnp.zeros((1, Mp), jnp.float32)

    # ------------- Leaves: one vectorized pass ------------------------------
    # Both children of a leaf are the zero row  =>  rzh = 0,  g = tanh(gx),
    # h = (1 - (z_l + z_r)/2) * g   with  z_* = sigmoid(rzx_*).
    grzx_leaf = grzx_ref[pl.ds(0, L), :]                 # (L, 3Mp)
    gx_leaf = grzx_leaf[:, :Mp]
    z_l_leaf = jax.nn.sigmoid(grzx_leaf[:, Mp:2 * Mp])
    z_r_leaf = jax.nn.sigmoid(grzx_leaf[:, 2 * Mp:3 * Mp])
    h_ref[pl.ds(0, L), :] = (1.0 - (z_l_leaf + z_r_leaf) * 0.5) * jnp.tanh(gx_leaf)

    aligned = (L % 8 == 0) and (T % 8 == 0)

    # ------------- Internal nodes: one dense batch per tree level -----------
    def level_body(lvl, carry):
        base = L + lvl * T
        if aligned:
            base = pl.multiple_of(base, 8)

        # Gather this level's child rows into contiguous (T, Mp) scratch tiles.
        # Iterations are independent -> unroll for LLO scheduling visibility.
        def gather(t, c):
            li = left_ref[lvl * T + t]
            ri = right_ref[lvl * T + t]
            childl_ref[pl.ds(t, 1), :] = h_ref[pl.ds(li, 1), :]
            childr_ref[pl.ds(t, 1), :] = h_ref[pl.ds(ri, 1), :]
            return c
        jax.lax.fori_loop(0, T, gather, 0, unroll=True)

        h_l = childl_ref[...]                            # (T, Mp) f32
        h_r = childr_ref[...]

        grzx = grzx_ref[pl.ds(base, T), :]               # (T, 3Mp)
        gx = grzx[:, :Mp]
        rzx_l = grzx[:, Mp:2 * Mp]
        rzx_r = grzx[:, 2 * Mp:3 * Mp]

        # rzh = concat([h_l, h_r]) @ Wrzh == h_l @ Wrzh[:Mp] + h_r @ Wrzh[Mp:]
        rzh = (jnp.dot(h_l.astype(jnp.bfloat16), whl_ref[...],
                       preferred_element_type=jnp.float32)
               + jnp.dot(h_r.astype(jnp.bfloat16), whr_ref[...],
                         preferred_element_type=jnp.float32))   # (T, 4Mp) f32

        r_l = jax.nn.sigmoid(rzx_l + rzh[:, 0 * Mp:1 * Mp])
        r_r = jax.nn.sigmoid(rzx_r + rzh[:, 1 * Mp:2 * Mp])
        z_l = jax.nn.sigmoid(rzx_l + rzh[:, 2 * Mp:3 * Mp])
        z_r = jax.nn.sigmoid(rzx_r + rzh[:, 3 * Mp:4 * Mp])

        rh = r_l * h_l + r_r * h_r
        g = jnp.tanh(gx + jnp.dot(rh.astype(jnp.bfloat16), wg_ref[...],
                                  preferred_element_type=jnp.float32))

        # h = sum_k z_k * h_k + (1 - sum_k z_k / 2) * g
        h_new = z_l * h_l + z_r * h_r + (1.0 - (z_l + z_r) * 0.5) * g
        h_ref[pl.ds(base, T), :] = h_new                 # dense (T, 128) store
        return carry

    jax.lax.fori_loop(0, D, level_body, 0)


# ----------------------------------------------------------------------------
# Host-side encoding: group internal nodes by height, pad each level to T rows
# ----------------------------------------------------------------------------
def _build_level_layout(left_idx, right_idx, num_leaves):
    left = np.asarray(left_idx, np.int64)
    right = np.asarray(right_idx, np.int64)
    n = left.shape[0]
    zero = n                                  # caller's "missing child" sentinel
    height = np.zeros(n + 1, np.int64)        # leaves / missing child -> 0
    for i in range(num_leaves, n):
        height[i] = 1 + max(height[left[i]], height[right[i]])
    d = int(height[:n].max()) if n > num_leaves else 0
    levels = [[] for _ in range(d)]
    for i in range(num_leaves, n):
        levels[height[i] - 1].append(i)
    max_sz = max((len(lv) for lv in levels), default=1)
    t = max(8, ((max_sz + 7) // 8) * 8)       # sublane-aligned level tile
    z_pad = num_leaves + d * t                # padded-layout zero row

    prow = np.zeros(n + 1, np.int64)          # original node -> padded row
    prow[:num_leaves] = np.arange(num_leaves)
    prow[zero] = z_pad
    for lv, nodes in enumerate(levels):
        for k, i in enumerate(nodes):
            prow[i] = num_leaves + lv * t + k

    left_pad = np.full(max(d * t, 1), z_pad, np.int32)
    right_pad = np.full(max(d * t, 1), z_pad, np.int32)
    x_src = np.full(num_leaves + d * t, -1, np.int64)   # padded row -> original node
    x_src[:num_leaves] = np.arange(num_leaves)
    for lv, nodes in enumerate(levels):
        for k, i in enumerate(nodes):
            s = lv * t + k
            left_pad[s] = prow[left[i]]
            right_pad[s] = prow[right[i]]
            x_src[num_leaves + s] = i
    perm = prow[:n].astype(np.int32)
    return left_pad, right_pad, x_src, perm, d, t


def _pad_gate_cols(w, n_gates, m, mp):
    """Pad each of the n_gates contiguous M-wide column blocks to Mp with zeros."""
    if mp == m:
        return w
    pad_shape = w.shape[:-1] + (mp - m,)
    parts = []
    for g in range(n_gates):
        parts.append(w[..., g * m:(g + 1) * m])
        parts.append(jnp.zeros(pad_shape, w.dtype))
    return jnp.concatenate(parts, axis=-1)


# ----------------------------------------------------------------------------
# Wrapper
# ----------------------------------------------------------------------------
def binary_tree_gru_forward(x_all, left_idx, right_idx, num_leaves,
                            w_grzx, b_grzx, w_rzh, w_gh):
    """Runs the full tree and returns per-node hidden states (N, mem_dim).

    Caller encoding: rows [0, num_leaves) are leaves; rows [num_leaves, N) are
    internal nodes with children at lower row indices; child index N means
    "missing child" (permanent zero state).
    """
    N, _ = x_all.shape
    M = w_gh.shape[0]
    Mp = ((M + 127) // 128) * 128             # lane-pad mem_dim to 128 multiples

    left_pad, right_pad, x_src, perm, D, T = _build_level_layout(
        left_idx, right_idx, num_leaves)

    if D == 0:                                # degenerate: leaves only, no kernel needed
        grzx = x_all @ w_grzx + b_grzx
        gx, rl, rr = grzx[:, :M], grzx[:, M:2 * M], grzx[:, 2 * M:3 * M]
        return (1.0 - (jax.nn.sigmoid(rl) + jax.nn.sigmoid(rr)) * 0.5) * jnp.tanh(gx)

    # -------- parameter prep (padded, lane-aligned, recurrent weights bf16) --------
    w_grzx_p = _pad_gate_cols(jnp.asarray(w_grzx, jnp.float32), 3, M, Mp)
    b_grzx_p = _pad_gate_cols(jnp.asarray(b_grzx, jnp.float32), 3, M, Mp)
    wh = jnp.asarray(w_rzh, jnp.float32)
    wh_l = _pad_gate_cols(jnp.pad(wh[:M], ((0, Mp - M), (0, 0))), 4, M, Mp)
    wh_r = _pad_gate_cols(jnp.pad(wh[M:], ((0, Mp - M), (0, 0))), 4, M, Mp)
    wg_p = jnp.pad(jnp.asarray(w_gh, jnp.float32), ((0, Mp - M), (0, Mp - M)))
    wh_l = wh_l.astype(jnp.bfloat16)
    wh_r = wh_r.astype(jnp.bfloat16)
    wg_p = wg_p.astype(jnp.bfloat16)

    # -------- level-padded per-node inputs + hoisted input projection --------
    gather_idx = np.where(x_src >= 0, x_src, 0)
    valid = jnp.asarray((x_src >= 0).astype(np.float32))[:, None]
    x_pad = jnp.asarray(x_all, jnp.float32)[gather_idx] * valid
    grzx_pad = (x_pad @ w_grzx_p + b_grzx_p).astype(jnp.float32)    # (L + D*T, 3Mp)

    rows = num_leaves + D * T + 1             # +1 permanent zero row

    def full_spec(shape):
        return pl.BlockSpec(shape, lambda *_: (0,) * len(shape))

    h_pad = pl.pallas_call(
        functools.partial(_tree_gru_kernel, mem_pad=Mp, num_leaves=num_leaves,
                          num_levels=D, level_tile=T),
        out_shape=jax.ShapeDtypeStruct((rows, Mp), jnp.float32),
        grid_spec=pltpu.PrefetchScalarGridSpec(
            num_scalar_prefetch=2,
            grid=(1,),                        # single step; traversal is in-kernel
            in_specs=[
                full_spec(grzx_pad.shape),
                full_spec(wh_l.shape),
                full_spec(wh_r.shape),
                full_spec(wg_p.shape),
            ],
            out_specs=full_spec((rows, Mp)),
            scratch_shapes=[pltpu.VMEM((T, Mp), jnp.float32),
                            pltpu.VMEM((T, Mp), jnp.float32)]),
        compiler_params=pltpu.CompilerParams(
            dimension_semantics=("arbitrary",),
            # Tiny footprint here; set explicitly so larger trees still fit the
            # v7x scoped-VMEM budget.  TODO(synk): re-derive per generation and
            # stream per-level grzx blocks for very large trees.
            vmem_limit_bytes=32 * 1024 * 1024),
    )(jnp.asarray(left_pad), jnp.asarray(right_pad),
      grzx_pad, wh_l, wh_r, wg_p)

    # Map level-major padded rows back to the caller's node order; drop lane padding.
    return h_pad[jnp.asarray(perm)][:, :M]


# ----------------------------------------------------------------------------
# Pure-JAX reference (mirrors the PyTorch node_forward / forward exactly)
# ----------------------------------------------------------------------------
def reference_forward(x_all, left_idx, right_idx, w_grzx, b_grzx, w_rzh, w_gh):
    N = x_all.shape[0]
    M = w_gh.shape[0]
    h = jnp.zeros((N + 1, M), jnp.float32)
    for i in range(N):
        x = x_all[i:i + 1]                                   # (1, in_dim)
        hl = h[int(left_idx[i])][None]
        hr = h[int(right_idx[i])][None]
        child_h = jnp.concatenate([hl, hr], axis=1)          # (1, 2M)
        grzx = x @ w_grzx + b_grzx
        gx, rzx = grzx[:, :M], grzx[:, M:]
        rzh = child_h @ w_rzh
        rz = jax.nn.sigmoid(jnp.concatenate([rzx, rzx], axis=1) + rzh)
        r = rz[:, :2 * M].reshape(2, M)
        z = rz[:, 2 * M:].reshape(2, M)
        ch = child_h.reshape(2, M)
        g = jnp.tanh(gx + jnp.sum(r * ch, axis=0)[None] @ w_gh)
        hh = jnp.sum(z * ch, axis=0) + (1.0 - jnp.sum(z, axis=0) / 2.0) * g[0]
        h = h.at[i].set(hh)
    return h[:N]


# ----------------------------------------------------------------------------
# Main
# ----------------------------------------------------------------------------
if __name__ == "__main__":
    in_dim = 32
    mem_dim = 32
    num_leaves = 8                      # balanced binary tree: 15 nodes total
    N = 2 * num_leaves - 1
    ZERO = N                            # index of the permanent zero-state row

    key = jax.random.PRNGKey(0)
    k_in, k_wx, k_wh, k_wg = jax.random.split(key, 4)

    # Leaf inputs (sequence of num_leaves token embeddings).
    inputs = (0.5 * jax.random.normal(k_in, (num_leaves, in_dim))
              ).astype(jnp.float32)

    # Parameters (deterministic init; mirrors rand_init: grzx bias zero except
    # the rz part which is set to 1).  Stored as (in_features, out_features).
    def uinit(k, shape, fan_in):
        bound = 1.0 / (fan_in ** 0.5)
        return jax.random.uniform(k, shape, jnp.float32, -bound, bound)

    w_grzx = uinit(k_wx, (in_dim, 3 * mem_dim), in_dim)
    b_grzx = jnp.concatenate(
        [jnp.zeros((1, mem_dim), jnp.float32),
         jnp.ones((1, 2 * mem_dim), jnp.float32)], axis=1)
    w_rzh = uinit(k_wh, (2 * mem_dim, 4 * mem_dim), 2 * mem_dim)
    w_gh = uinit(k_wg, (mem_dim, mem_dim), mem_dim)

    # TODO(synk): forward_dropout / semeniuta_dropout are eval-mode identity;
    # the dynamic Python tree object is encoded as flat child-index arrays.

    # Balanced binary tree, leaves first, children-before-parents:
    #   nodes 0..7  = leaves (use inputs[idx], no children)
    #   nodes 8..11 = combine (0,1) (2,3) (4,5) (6,7)
    #   nodes 12,13 = combine (8,9) (10,11)
    #   node  14    = combine (12,13)   -> root
    left_list = [ZERO] * num_leaves + [0, 2, 4, 6, 8, 10, 12]
    right_list = [ZERO] * num_leaves + [1, 3, 5, 7, 9, 11, 13]
    left_idx = np.asarray(left_list, np.int32)
    right_idx = np.asarray(right_list, np.int32)

    # Per-node x: leaves take their input row, internal nodes take zeros.
    x_all = jnp.concatenate(
        [inputs, jnp.zeros((N - num_leaves, in_dim), jnp.float32)], axis=0)

    out = binary_tree_gru_forward(x_all, left_idx, right_idx, num_leaves,
                                  w_grzx, b_grzx, w_rzh, w_gh)
    out = jax.block_until_ready(out)

    ref = reference_forward(x_all, left_idx, right_idx,
                            w_grzx, b_grzx, w_rzh, w_gh)

    assert out.shape == (N, mem_dim)
    # Kernel uses bf16 MXU operands with f32 accumulation; the f32 reference
    # uses default TPU matmul precision -> tolerance reflects bf16 rounding
    # accumulated over tree depth (values are tanh/sigmoid-bounded).
    assert jnp.allclose(out, ref, atol=3e-2, rtol=3e-2), (
        f"max abs err = {jnp.max(jnp.abs(out - ref))}")

    print("KERNEL_OK")
</pallas_src>

<mosaic_0001>
module attributes {stable_mosaic.version = 11 : i64} {
  func.func @_tree_gru_kernel(%arg0: i32, %arg1: memref<24xi32, #tpu.memory_space<smem>>, %arg2: memref<24xi32, #tpu.memory_space<smem>>, %arg3: memref<32x384xf32, #tpu.memory_space<vmem>>, %arg4: memref<128x512xbf16, #tpu.memory_space<vmem>>, %arg5: memref<128x512xbf16, #tpu.memory_space<vmem>>, %arg6: memref<128x128xbf16, #tpu.memory_space<vmem>>, %arg7: memref<33x128xf32, #tpu.memory_space<vmem>>, %arg8: memref<8x128xf32, #tpu.memory_space<vmem>>, %arg9: memref<8x128xf32, #tpu.memory_space<vmem>>) attributes {dimension_semantics = [#tpu.dimension_semantics<arbitrary>], iteration_bounds = array<i64: 1>, scalar_prefetch = 2 : i64, scratch_operands = 2 : i64, tpu.core_type = #tpu.core_type<tc>, window_params = [{pipeline_mode = #tpu.pipeline_mode<synchronous>, transform_indices = @transform_0, window_bounds = array<i64: 32, 384>}, {pipeline_mode = #tpu.pipeline_mode<synchronous>, transform_indices = @transform_1, window_bounds = array<i64: 128, 512>}, {pipeline_mode = #tpu.pipeline_mode<synchronous>, transform_indices = @transform_2, window_bounds = array<i64: 128, 512>}, {pipeline_mode = #tpu.pipeline_mode<synchronous>, transform_indices = @transform_3, window_bounds = array<i64: 128, 128>}, {pipeline_mode = #tpu.pipeline_mode<synchronous>, transform_indices = @transform_4, window_bounds = array<i64: 33, 128>}]} {
    %cst = arith.constant 0.000000e+00 : f32
    %0 = vector.broadcast %cst : f32 to vector<1x128xf32>
    %c32 = arith.constant 32 : index
    %c0 = arith.constant 0 : index
    %1 = vector.load %arg7[%c32, %c0] : memref<33x128xf32, #tpu.memory_space<vmem>>, vector<1x128xf32>
    tpu.vector_store %arg7[%c32, %c0], %0 {strides = array<i32>} : memref<33x128xf32, #tpu.memory_space<vmem>>, vector<1x128xf32>,
    %c0_0 = arith.constant 0 : index
    %c0_1 = arith.constant 0 : index
    %2 = vector.load %arg3[%c0_0, %c0_1] : memref<32x384xf32, #tpu.memory_space<vmem>>, vector<8x384xf32>
    %3 = vector.extract_strided_slice %2 {offsets = [0, 0], sizes = [8, 128], strides = [1, 1]} : vector<8x384xf32> to vector<8x128xf32>
    %4 = vector.extract_strided_slice %2 {offsets = [0, 128], sizes = [8, 128], strides = [1, 1]} : vector<8x384xf32> to vector<8x128xf32>
    %5 = arith.negf %4 : vector<8x128xf32>
    %6 = math.exp %5 : vector<8x128xf32>
    %cst_2 = arith.constant 1.000000e+00 : f32
    %7 = vector.broadcast %cst_2 : f32 to vector<8x128xf32>
    %8 = arith.addf %7, %6 : vector<8x128xf32>
    %9 = arith.divf %7, %8 : vector<8x128xf32>
    %10 = vector.extract_strided_slice %2 {offsets = [0, 256], sizes = [8, 128], strides = [1, 1]} : vector<8x384xf32> to vector<8x128xf32>
    %11 = arith.negf %10 : vector<8x128xf32>
    %12 = math.exp %11 : vector<8x128xf32>
    %cst_3 = arith.constant 1.000000e+00 : f32
    %13 = vector.broadcast %cst_3 : f32 to vector<8x128xf32>
    %14 = arith.addf %13, %12 : vector<8x128xf32>
    %15 = arith.divf %13, %14 : vector<8x128xf32>
    %16 = arith.addf %9, %15 : vector<8x128xf32>
    %cst_4 = arith.constant 5.000000e-01 : f32
    %17 = vector.broadcast %cst_4 : f32 to vector<8x128xf32>
    %18 = arith.mulf %16, %17 : vector<8x128xf32>
    %cst_5 = arith.constant 1.000000e+00 : f32
    %19 = vector.broadcast %cst_5 : f32 to vector<8x128xf32>
    %20 = arith.subf %19, %18 : vector<8x128xf32>
    %21 = math.tanh %3 : vector<8x128xf32>
    %22 = arith.mulf %20, %21 : vector<8x128xf32>
    %c0_6 = arith.constant 0 : index
    %c0_7 = arith.constant 0 : index
    %23 = vector.load %arg7[%c0_6, %c0_7] : memref<33x128xf32, #tpu.memory_space<vmem>>, vector<8x128xf32>
    tpu.vector_store %arg7[%c0_6, %c0_7], %22 {strides = array<i32>} : memref<33x128xf32, #tpu.memory_space<vmem>>, vector<8x128xf32>,
    %c0_i32 = arith.constant 0 : i32
    %c3_i32 = arith.constant 3 : i32
    %24 = arith.addi %c0_i32, %c3_i32 : i32
    %c1_i32 = arith.constant 1 : i32
    scf.for %arg10 = %c0_i32 to %24 step %c1_i32  : i32 {
      %c8_i32 = arith.constant 8 : i32
      %25 = arith.muli %arg10, %c8_i32 : i32
      %c8_i32_9 = arith.constant 8 : i32
      %26 = arith.addi %c8_i32_9, %25 : i32
      %27 = tpu.assume_multiple %26, 8 : i32
      %c0_i32_10 = arith.constant 0 : i32
      %c8_i32_11 = arith.constant 8 : i32
      %28 = arith.muli %arg10, %c8_i32_11 : i32
      %29 = arith.addi %28, %c0_i32_10 : i32
      %30 = arith.index_cast %29 : i32 to index
      %31 = memref.load %arg1[%30] : memref<24xi32, #tpu.memory_space<smem>>
      %c8_i32_12 = arith.constant 8 : i32
      %32 = arith.muli %arg10, %c8_i32_12 : i32
      %33 = arith.addi %32, %c0_i32_10 : i32
      %34 = arith.index_cast %33 : i32 to index
      %35 = memref.load %arg2[%34] : memref<24xi32, #tpu.memory_space<smem>>
      %36 = arith.index_cast %31 : i32 to index
      %c0_13 = arith.constant 0 : index
      %37 = vector.load %arg7[%36, %c0_13] : memref<33x128xf32, #tpu.memory_space<vmem>>, vector<1x128xf32>
      %38 = arith.index_cast %c0_i32_10 : i32 to index
      %c0_14 = arith.constant 0 : index
      %39 = vector.load %arg8[%38, %c0_14] : memref<8x128xf32, #tpu.memory_space<vmem>>, vector<1x128xf32>
      tpu.vector_store %arg8[%38, %c0_14], %37 {strides = array<i32>} : memref<8x128xf32, #tpu.memory_space<vmem>>, vector<1x128xf32>,
      %40 = arith.index_cast %35 : i32 to index
      %c0_15 = arith.constant 0 : index
      %41 = vector.load %arg7[%40, %c0_15] : memref<33x128xf32, #tpu.memory_space<vmem>>, vector<1x128xf32>
      %42 = arith.index_cast %c0_i32_10 : i32 to index
      %c0_16 = arith.constant 0 : index
      %43 = vector.load %arg9[%42, %c0_16] : memref<8x128xf32, #tpu.memory_space<vmem>>, vector<1x128xf32>
      tpu.vector_store %arg9[%42, %c0_16], %41 {strides = array<i32>} : memref<8x128xf32, #tpu.memory_space<vmem>>, vector<1x128xf32>,
      %c1_i32_17 = arith.constant 1 : i32
      %c8_i32_18 = arith.constant 8 : i32
      %44 = arith.muli %arg10, %c8_i32_18 : i32
      %45 = arith.addi %44, %c1_i32_17 : i32
      %46 = arith.index_cast %45 : i32 to index
      %47 = memref.load %arg1[%46] : memref<24xi32, #tpu.memory_space<smem>>
      %c8_i32_19 = arith.constant 8 : i32
      %48 = arith.muli %arg10, %c8_i32_19 : i32
      %49 = arith.addi %48, %c1_i32_17 : i32
      %50 = arith.index_cast %49 : i32 to index
      %51 = memref.load %arg2[%50] : memref<24xi32, #tpu.memory_space<smem>>
      %52 = arith.index_cast %47 : i32 to index
      %c0_20 = arith.constant 0 : index
      %53 = vector.load %arg7[%52, %c0_20] : memref<33x128xf32, #tpu.memory_space<vmem>>, vector<1x128xf32>
      %54 = arith.index_cast %c1_i32_17 : i32 to index
      %c0_21 = arith.constant 0 : index
      %55 = vector.load %arg8[%54, %c0_21] : memref<8x128xf32, #tpu.memory_space<vmem>>, vector<1x128xf32>
      tpu.vector_store %arg8[%54, %c0_21], %53 {strides = array<i32>} : memref<8x128xf32, #tpu.memory_space<vmem>>, vector<1x128xf32>,
      %56 = arith.index_cast %51 : i32 to index
      %c0_22 = arith.constant 0 : index
      %57 = vector.load %arg7[%56, %c0_22] : memref<33x128xf32, #tpu.memory_space<vmem>>, vector<1x128xf32>
      %58 = arith.index_cast %c1_i32_17 : i32 to index
      %c0_23 = arith.constant 0 : index
      %59 = vector.load %arg9[%58, %c0_23] : memref<8x128xf32, #tpu.memory_space<vmem>>, vector<1x128xf32>
      tpu.vector_store %arg9[%58, %c0_23], %57 {strides = array<i32>} : memref<8x128xf32, #tpu.memory_space<vmem>>, vector<1x128xf32>,
      %c2_i32 = arith.constant 2 : i32
      %c8_i32_24 = arith.constant 8 : i32
      %60 = arith.muli %arg10, %c8_i32_24 : i32
      %61 = arith.addi %60, %c2_i32 : i32
      %62 = arith.index_cast %61 : i32 to index
      %63 = memref.load %arg1[%62] : memref<24xi32, #tpu.memory_space<smem>>
      %c8_i32_25 = arith.constant 8 : i32
      %64 = arith.muli %arg10, %c8_i32_25 : i32
      %65 = arith.addi %64, %c2_i32 : i32
      %66 = arith.index_cast %65 : i32 to index
      %67 = memref.load %arg2[%66] : memref<24xi32, #tpu.memory_space<smem>>
      %68 = arith.index_cast %63 : i32 to index
      %c0_26 = arith.constant 0 : index
      %69 = vector.load %arg7[%68, %c0_26] : memref<33x128xf32, #tpu.memory_space<vmem>>, vector<1x128xf32>
      %70 = arith.index_cast %c2_i32 : i32 to index
      %c0_27 = arith.constant 0 : index
      %71 = vector.load %arg8[%70, %c0_27] : memref<8x128xf32, #tpu.memory_space<vmem>>, vector<1x128xf32>
      tpu.vector_store %arg8[%70, %c0_27], %69 {strides = array<i32>} : memref<8x128xf32, #tpu.memory_space<vmem>>, vector<1x128xf32>,
      %72 = arith.index_cast %67 : i32 to index
      %c0_28 = arith.constant 0 : index
      %73 = vector.load %arg7[%72, %c0_28] : memref<33x128xf32, #tpu.memory_space<vmem>>, vector<1x128xf32>
      %74 = arith.index_cast %c2_i32 : i32 to index
      %c0_29 = arith.constant 0 : index
      %75 = vector.load %arg9[%74, %c0_29] : memref<8x128xf32, #tpu.memory_space<vmem>>, vector<1x128xf32>
      tpu.vector_store %arg9[%74, %c0_29], %73 {strides = array<i32>} : memref<8x128xf32, #tpu.memory_space<vmem>>, vector<1x128xf32>,
      %c3_i32_30 = arith.constant 3 : i32
      %c8_i32_31 = arith.constant 8 : i32
      %76 = arith.muli %arg10, %c8_i32_31 : i32
      %77 = arith.addi %76, %c3_i32_30 : i32
      %78 = arith.index_cast %77 : i32 to index
      %79 = memref.load %arg1[%78] : memref<24xi32, #tpu.memory_space<smem>>
      %c8_i32_32 = arith.constant 8 : i32
      %80 = arith.muli %arg10, %c8_i32_32 : i32
      %81 = arith.addi %80, %c3_i32_30 : i32
      %82 = arith.index_cast %81 : i32 to index
      %83 = memref.load %arg2[%82] : memref<24xi32, #tpu.memory_space<smem>>
      %84 = arith.index_cast %79 : i32 to index
      %c0_33 = arith.constant 0 : index
      %85 = vector.load %arg7[%84, %c0_33] : memref<33x128xf32, #tpu.memory_space<vmem>>, vector<1x128xf32>
      %86 = arith.index_cast %c3_i32_30 : i32 to index
      %c0_34 = arith.constant 0 : index
      %87 = vector.load %arg8[%86, %c0_34] : memref<8x128xf32, #tpu.memory_space<vmem>>, vector<1x128xf32>
      tpu.vector_store %arg8[%86, %c0_34], %85 {strides = array<i32>} : memref<8x128xf32, #tpu.memory_space<vmem>>, vector<1x128xf32>,
      %88 = arith.index_cast %83 : i32 to index
      %c0_35 = arith.constant 0 : index
      %89 = vector.load %arg7[%88, %c0_35] : memref<33x128xf32, #tpu.memory_space<vmem>>, vector<1x128xf32>
      %90 = arith.index_cast %c3_i32_30 : i32 to index
      %c0_36 = arith.constant 0 : index
      %91 = vector.load %arg9[%90, %c0_36] : memref<8x128xf32, #tpu.memory_space<vmem>>, vector<1x128xf32>
      tpu.vector_store %arg9[%90, %c0_36], %89 {strides = array<i32>} : memref<8x128xf32, #tpu.memory_space<vmem>>, vector<1x128xf32>,
      %c4_i32 = arith.constant 4 : i32
      %c8_i32_37 = arith.constant 8 : i32
      %92 = arith.muli %arg10, %c8_i32_37 : i32
      %93 = arith.addi %92, %c4_i32 : i32
      %94 = arith.index_cast %93 : i32 to index
      %95 = memref.load %arg1[%94] : memref<24xi32, #tpu.memory_space<smem>>
      %c8_i32_38 = arith.constant 8 : i32
      %96 = arith.muli %arg10, %c8_i32_38 : i32
      %97 = arith.addi %96, %c4_i32 : i32
      %98 = arith.index_cast %97 : i32 to index
      %99 = memref.load %arg2[%98] : memref<24xi32, #tpu.memory_space<smem>>
      %100 = arith.index_cast %95 : i32 to index
      %c0_39 = arith.constant 0 : index
      %101 = vector.load %arg7[%100, %c0_39] : memref<33x128xf32, #tpu.memory_space<vmem>>, vector<1x128xf32>
      %102 = arith.index_cast %c4_i32 : i32 to index
      %c0_40 = arith.constant 0 : index
      %103 = vector.load %arg8[%102, %c0_40] : memref<8x128xf32, #tpu.memory_space<vmem>>, vector<1x128xf32>
      tpu.vector_store %arg8[%102, %c0_40], %101 {strides = array<i32>} : memref<8x128xf32, #tpu.memory_space<vmem>>, vector<1x128xf32>,
      %104 = arith.index_cast %99 : i32 to index
      %c0_41 = arith.constant 0 : index
      %105 = vector.load %arg7[%104, %c0_41] : memref<33x128xf32, #tpu.memory_space<vmem>>, vector<1x128xf32>
      %106 = arith.index_cast %c4_i32 : i32 to index
      %c0_42 = arith.constant 0 : index
      %107 = vector.load %arg9[%106, %c0_42] : memref<8x128xf32, #tpu.memory_space<vmem>>, vector<1x128xf32>
      tpu.vector_store %arg9[%106, %c0_42], %105 {strides = array<i32>} : memref<8x128xf32, #tpu.memory_space<vmem>>, vector<1x128xf32>,
      %c5_i32 = arith.constant 5 : i32
      %c8_i32_43 = arith.constant 8 : i32
      %108 = arith.muli %arg10, %c8_i32_43 : i32
      %109 = arith.addi %108, %c5_i32 : i32
      %110 = arith.index_cast %109 : i32 to index
      %111 = memref.load %arg1[%110] : memref<24xi32, #tpu.memory_space<smem>>
      %c8_i32_44 = arith.constant 8 : i32
      %112 = arith.muli %arg10, %c8_i32_44 : i32
      %113 = arith.addi %112, %c5_i32 : i32
      %114 = arith.index_cast %113 : i32 to index
      %115 = memref.load %arg2[%114] : memref<24xi32, #tpu.memory_space<smem>>
      %116 = arith.index_cast %111 : i32 to index
      %c0_45 = arith.constant 0 : index
      %117 = vector.load %arg7[%116, %c0_45] : memref<33x128xf32, #tpu.memory_space<vmem>>, vector<1x128xf32>
      %118 = arith.index_cast %c5_i32 : i32 to index
      %c0_46 = arith.constant 0 : index
      %119 = vector.load %arg8[%118, %c0_46] : memref<8x128xf32, #tpu.memory_space<vmem>>, vector<1x128xf32>
      tpu.vector_store %arg8[%118, %c0_46], %117 {strides = array<i32>} : memref<8x128xf32, #tpu.memory_space<vmem>>, vector<1x128xf32>,
      %120 = arith.index_cast %115 : i32 to index
      %c0_47 = arith.constant 0 : index
      %121 = vector.load %arg7[%120, %c0_47] : memref<33x128xf32, #tpu.memory_space<vmem>>, vector<1x128xf32>
      %122 = arith.index_cast %c5_i32 : i32 to index
      %c0_48 = arith.constant 0 : index
      %123 = vector.load %arg9[%122, %c0_48] : memref<8x128xf32, #tpu.memory_space<vmem>>, vector<1x128xf32>
      tpu.vector_store %arg9[%122, %c0_48], %121 {strides = array<i32>} : memref<8x128xf32, #tpu.memory_space<vmem>>, vector<1x128xf32>,
      %c6_i32 = arith.constant 6 : i32
      %c8_i32_49 = arith.constant 8 : i32
      %124 = arith.muli %arg10, %c8_i32_49 : i32
      %125 = arith.addi %124, %c6_i32 : i32
      %126 = arith.index_cast %125 : i32 to index
      %127 = memref.load %arg1[%126] : memref<24xi32, #tpu.memory_space<smem>>
      %c8_i32_50 = arith.constant 8 : i32
      %128 = arith.muli %arg10, %c8_i32_50 : i32
      %129 = arith.addi %128, %c6_i32 : i32
      %130 = arith.index_cast %129 : i32 to index
      %131 = memref.load %arg2[%130] : memref<24xi32, #tpu.memory_space<smem>>
      %132 = arith.index_cast %127 : i32 to index
      %c0_51 = arith.constant 0 : index
      %133 = vector.load %arg7[%132, %c0_51] : memref<33x128xf32, #tpu.memory_space<vmem>>, vector<1x128xf32>
      %134 = arith.index_cast %c6_i32 : i32 to index
      %c0_52 = arith.constant 0 : index
      %135 = vector.load %arg8[%134, %c0_52] : memref<8x128xf32, #tpu.memory_space<vmem>>, vector<1x128xf32>
      tpu.vector_store %arg8[%134, %c0_52], %133 {strides = array<i32>} : memref<8x128xf32, #tpu.memory_space<vmem>>, vector<1x128xf32>,
      %136 = arith.index_cast %131 : i32 to index
      %c0_53 = arith.constant 0 : index
      %137 = vector.load %arg7[%136, %c0_53] : memref<33x128xf32, #tpu.memory_space<vmem>>, vector<1x128xf32>
      %138 = arith.index_cast %c6_i32 : i32 to index
      %c0_54 = arith.constant 0 : index
      %139 = vector.load %arg9[%138, %c0_54] : memref<8x128xf32, #tpu.memory_space<vmem>>, vector<1x128xf32>
      tpu.vector_store %arg9[%138, %c0_54], %137 {strides = array<i32>} : memref<8x128xf32, #tpu.memory_space<vmem>>, vector<1x128xf32>,
      %c7_i32 = arith.constant 7 : i32
      %c8_i32_55 = arith.constant 8 : i32
      %140 = arith.muli %arg10, %c8_i32_55 : i32
      %141 = arith.addi %140, %c7_i32 : i32
      %142 = arith.index_cast %141 : i32 to index
      %143 = memref.load %arg1[%142] : memref<24xi32, #tpu.memory_space<smem>>
      %c8_i32_56 = arith.constant 8 : i32
      %144 = arith.muli %arg10, %c8_i32_56 : i32
      %145 = arith.addi %144, %c7_i32 : i32
      %146 = arith.index_cast %145 : i32 to index
      %147 = memref.load %arg2[%146] : memref<24xi32, #tpu.memory_space<smem>>
      %148 = arith.index_cast %143 : i32 to index
      %c0_57 = arith.constant 0 : index
      %149 = vector.load %arg7[%148, %c0_57] : memref<33x128xf32, #tpu.memory_space<vmem>>, vector<1x128xf32>
      %150 = arith.index_cast %c7_i32 : i32 to index
      %c0_58 = arith.constant 0 : index
      %151 = vector.load %arg8[%150, %c0_58] : memref<8x128xf32, #tpu.memory_space<vmem>>, vector<1x128xf32>
      tpu.vector_store %arg8[%150, %c0_58], %149 {strides = array<i32>} : memref<8x128xf32, #tpu.memory_space<vmem>>, vector<1x128xf32>,
      %152 = arith.index_cast %147 : i32 to index
      %c0_59 = arith.constant 0 : index
      %153 = vector.load %arg7[%152, %c0_59] : memref<33x128xf32, #tpu.memory_space<vmem>>, vector<1x128xf32>
      %154 = arith.index_cast %c7_i32 : i32 to index
      %c0_60 = arith.constant 0 : index
      %155 = vector.load %arg9[%154, %c0_60] : memref<8x128xf32, #tpu.memory_space<vmem>>, vector<1x128xf32>
      tpu.vector_store %arg9[%154, %c0_60], %153 {strides = array<i32>} : memref<8x128xf32, #tpu.memory_space<vmem>>, vector<1x128xf32>,
      %c8_i32_61 = arith.constant 8 : i32
      %c0_62 = arith.constant 0 : index
      %c0_63 = arith.constant 0 : index
      %156 = vector.load %arg8[%c0_62, %c0_63] : memref<8x128xf32, #tpu.memory_space<vmem>>, vector<8x128xf32>
      %c0_64 = arith.constant 0 : index
      %c0_65 = arith.constant 0 : index
      %157 = vector.load %arg9[%c0_64, %c0_65] : memref<8x128xf32, #tpu.memory_space<vmem>>, vector<8x128xf32>
      %158 = arith.index_cast %27 : i32 to index
      %c0_66 = arith.constant 0 : index
      %159 = vector.load %arg3[%158, %c0_66] : memref<32x384xf32, #tpu.memory_space<vmem>>, vector<8x384xf32>
      %160 = vector.extract_strided_slice %159 {offsets = [0, 0], sizes = [8, 128], strides = [1, 1]} : vector<8x384xf32> to vector<8x128xf32>
      %161 = vector.extract_strided_slice %159 {offsets = [0, 128], sizes = [8, 128], strides = [1, 1]} : vector<8x384xf32> to vector<8x128xf32>
      %162 = vector.extract_strided_slice %159 {offsets = [0, 256], sizes = [8, 128], strides = [1, 1]} : vector<8x384xf32> to vector<8x128xf32>
      %163 = arith.truncf %156 : vector<8x128xf32> to vector<8x128xbf16>
      %c0_67 = arith.constant 0 : index
      %c0_68 = arith.constant 0 : index
      %164 = vector.load %arg4[%c0_67, %c0_68] : memref<128x512xbf16, #tpu.memory_space<vmem>>, vector<128x512xbf16>
      %cst_69 = arith.constant dense<0.000000e+00> : vector<8x512xf32>
      %165 = tpu.matmul %163, %164, %cst_69 {dimension_numbers = #tpu.dot_dimension_numbers<[1], [0], [0], [1], [0, 0, 1, 1], [], []>} : vector<8x128xbf16>, vector<128x512xbf16>, vector<8x512xf32> -> vector<8x512xf32>
      %166 = arith.truncf %157 : vector<8x128xf32> to vector<8x128xbf16>
      %c0_70 = arith.constant 0 : index
      %c0_71 = arith.constant 0 : index
      %167 = vector.load %arg5[%c0_70, %c0_71] : memref<128x512xbf16, #tpu.memory_space<vmem>>, vector<128x512xbf16>
      %cst_72 = arith.constant dense<0.000000e+00> : vector<8x512xf32>
      %168 = tpu.matmul %166, %167, %cst_72 {dimension_numbers = #tpu.dot_dimension_numbers<[1], [0], [0], [1], [0, 0, 1, 1], [], []>} : vector<8x128xbf16>, vector<128x512xbf16>, vector<8x512xf32> -> vector<8x512xf32>
      %169 = arith.addf %165, %168 : vector<8x512xf32>
      %170 = vector.extract_strided_slice %169 {offsets = [0, 0], sizes = [8, 128], strides = [1, 1]} : vector<8x512xf32> to vector<8x128xf32>
      %171 = arith.addf %161, %170 : vector<8x128xf32>
      %172 = arith.negf %171 : vector<8x128xf32>
      %173 = math.exp %172 : vector<8x128xf32>
      %cst_73 = arith.constant 1.000000e+00 : f32
      %174 = vector.broadcast %cst_73 : f32 to vector<8x128xf32>
      %175 = arith.addf %174, %173 : vector<8x128xf32>
      %176 = arith.divf %174, %175 : vector<8x128xf32>
      %177 = vector.extract_strided_slice %169 {offsets = [0, 128], sizes = [8, 128], strides = [1, 1]} : vector<8x512xf32> to vector<8x128xf32>
      %178 = arith.addf %162, %177 : vector<8x128xf32>
      %179 = arith.negf %178 : vector<8x128xf32>
      %180 = math.exp %179 : vector<8x128xf32>
      %cst_74 = arith.constant 1.000000e+00 : f32
      %181 = vector.broadcast %cst_74 : f32 to vector<8x128xf32>
      %182 = arith.addf %181, %180 : vector<8x128xf32>
      %183 = arith.divf %181, %182 : vector<8x128xf32>
      %184 = vector.extract_strided_slice %169 {offsets = [0, 256], sizes = [8, 128], strides = [1, 1]} : vector<8x512xf32> to vector<8x128xf32>
      %185 = arith.addf %161, %184 : vector<8x128xf32>
      %186 = arith.negf %185 : vector<8x128xf32>
      %187 = math.exp %186 : vector<8x128xf32>
      %cst_75 = arith.constant 1.000000e+00 : f32
      %188 = vector.broadcast %cst_75 : f32 to vector<8x128xf32>
      %189 = arith.addf %188, %187 : vector<8x128xf32>
      %190 = arith.divf %188, %189 : vector<8x128xf32>
      %191 = vector.extract_strided_slice %169 {offsets = [0, 384], sizes = [8, 128], strides = [1, 1]} : vector<8x512xf32> to vector<8x128xf32>
      %192 = arith.addf %162, %191 : vector<8x128xf32>
      %193 = arith.negf %192 : vector<8x128xf32>
      %194 = math.exp %193 : vector<8x128xf32>
      %cst_76 = arith.constant 1.000000e+00 : f32
      %195 = vector.broadcast %cst_76 : f32 to vector<8x128xf32>
      %196 = arith.addf %195, %194 : vector<8x128xf32>
      %197 = arith.divf %195, %196 : vector<8x128xf32>
      %198 = arith.mulf %176, %156 : vector<8x128xf32>
      %199 = arith.mulf %183, %157 : vector<8x128xf32>
      %200 = arith.addf %198, %199 : vector<8x128xf32>
      %201 = arith.truncf %200 : vector<8x128xf32> to vector<8x128xbf16>
      %c0_77 = arith.constant 0 : index
      %c0_78 = arith.constant 0 : index
      %202 = vector.load %arg6[%c0_77, %c0_78] : memref<128x128xbf16, #tpu.memory_space<vmem>>, vector<128x128xbf16>
      %cst_79 = arith.constant dense<0.000000e+00> : vector<8x128xf32>
      %203 = tpu.matmul %201, %202, %cst_79 {dimension_numbers = #tpu.dot_dimension_numbers<[1], [0], [0], [1], [0, 0, 1, 1], [], []>} : vector<8x128xbf16>, vector<128x128xbf16>, vector<8x128xf32> -> vector<8x128xf32>
      %204 = arith.addf %160, %203 : vector<8x128xf32>
      %205 = math.tanh %204 : vector<8x128xf32>
      %206 = arith.mulf %190, %156 : vector<8x128xf32>
      %207 = arith.mulf %197, %157 : vector<8x128xf32>
      %208 = arith.addf %206, %207 : vector<8x128xf32>
      %209 = arith.addf %190, %197 : vector<8x128xf32>
      %cst_80 = arith.constant 5.000000e-01 : f32
      %210 = vector.broadcast %cst_80 : f32 to vector<8x128xf32>
      %211 = arith.mulf %209, %210 : vector<8x128xf32>
      %cst_81 = arith.constant 1.000000e+00 : f32
      %212 = vector.broadcast %cst_81 : f32 to vector<8x128xf32>
      %213 = arith.subf %212, %211 : vector<8x128xf32>
      %214 = arith.mulf %213, %205 : vector<8x128xf32>
      %215 = arith.addf %208, %214 : vector<8x128xf32>
      %216 = arith.index_cast %27 : i32 to index
      %c0_82 = arith.constant 0 : index
      %217 = vector.load %arg7[%216, %c0_82] : memref<33x128xf32, #tpu.memory_space<vmem>>, vector<8x128xf32>
      tpu.vector_store %arg7[%216, %c0_82], %215 {strides = array<i32>} : memref<33x128xf32, #tpu.memory_space<vmem>>, vector<8x128xf32>,
    }
    %c3_i32_8 = arith.constant 3 : i32
    return
  }
  func.func @transform_0(%arg0: i32, %arg1: memref<24xi32, #tpu.memory_space<smem>>, %arg2: memref<24xi32, #tpu.memory_space<smem>>) -> (i32, i32) {
    %c0_i32 = arith.constant 0 : i32
    %c0_i32_0 = arith.constant 0 : i32
    %c0_i32_1 = arith.constant 0 : i32
    return %c0_i32, %c0_i32_0 : i32, i32
  }
  func.func @transform_1(%arg0: i32, %arg1: memref<24xi32, #tpu.memory_space<smem>>, %arg2: memref<24xi32, #tpu.memory_space<smem>>) -> (i32, i32) {
    %c0_i32 = arith.constant 0 : i32
    %c0_i32_0 = arith.constant 0 : i32
    %c0_i32_1 = arith.constant 0 : i32
    return %c0_i32, %c0_i32_0 : i32, i32
  }
  func.func @transform_2(%arg0: i32, %arg1: memref<24xi32, #tpu.memory_space<smem>>, %arg2: memref<24xi32, #tpu.memory_space<smem>>) -> (i32, i32) {
    %c0_i32 = arith.constant 0 : i32
    %c0_i32_0 = arith.constant 0 : i32
    %c0_i32_1 = arith.constant 0 : i32
    return %c0_i32, %c0_i32_0 : i32, i32
  }
  func.func @transform_3(%arg0: i32, %arg1: memref<24xi32, #tpu.memory_space<smem>>, %arg2: memref<24xi32, #tpu.memory_space<smem>>) -> (i32, i32) {
    %c0_i32 = arith.constant 0 : i32
    %c0_i32_0 = arith.constant 0 : i32
    %c0_i32_1 = arith.constant 0 : i32
    return %c0_i32, %c0_i32_0 : i32, i32
  }
  func.func @transform_4(%arg0: i32, %arg1: memref<24xi32, #tpu.memory_space<smem>>, %arg2: memref<24xi32, #tpu.memory_space<smem>>) -> (i32, i32) {
    %c0_i32 = arith.constant 0 : i32
    %c0_i32_0 = arith.constant 0 : i32
    %c0_i32_1 = arith.constant 0 : i32
    return %c0_i32, %c0_i32_0 : i32, i32
  }
}

</mosaic_0001>

<llo_original>
// kernel: tpu_custom_call.1
$region0: #{tpu_custom_call.1}
  #allocation0 [shape = 'u32[]', space=smem, size = 0x4, offset = 0x4, fixed_abs, tag = 'smem constant byte address 0x4 - core index']
  #allocation1 [shape = 'u32[144,128]{1,0:T(1,128)}', space=vmem, size = 0x12000, scoped, tag = 'internal scratch']
  #allocation2 [shape = 'f32[8,128]{1,0:T(8,128)}', space=vmem, size = 0x1000, scoped, tag = 'scratch operand']
  #allocation3 [shape = 'f32[8,128]{1,0:T(8,128)}', space=vmem, size = 0x1000, scoped, tag = 'scratch operand']
  #allocation4 [shape = 's32[1]{0}', space=sflag, size = 0x4, scoped, tag = 'scoped memory for tpu_custom_call.1']
  #allocation5 [shape = 'u8[512]{0}', space=smem, size = 0x200, scoped, tag = 'prefetched SMEM operand 0']
  #allocation6 [shape = 'u8[512]{0}', space=smem, size = 0x200, scoped, tag = 'prefetched SMEM operand 1']
  %s0 = inlined_call_operand.hbm [shape: s32[24], index: 0, kind: input, shape index: {}]
  %s1 = inlined_call_operand.vmem [shape: s32[24], index: 1, kind: input, shape index: {}]
  %s2 = inlined_call_operand.hbm [shape: f32[32,384], index: 2, kind: input, shape index: {}]
  %s3 = inlined_call_operand.hbm [shape: bf16[128,512], index: 3, kind: input, shape index: {}]
  %s4 = inlined_call_operand.hbm [shape: bf16[128,512], index: 4, kind: input, shape index: {}]
  %s5 = inlined_call_operand.hbm [shape: bf16[128,128], index: 5, kind: input, shape index: {}]
  %s6 = inlined_call_operand.hbm [shape: f32[33,128], index: 6, kind: output, shape index: {}]
  %s7 = sld [smem:[#allocation0]]
  $region49: #{tpu_custom_call.1} parent=0
    _
  %s9 = ssub.s32 1, %s7
  %s10 = scalar_select 0, %s9, %s7
  %12 = dma.hbm_to_smem %s0, 16, [#allocation5], [#allocation4]
  %s13 = sshll.u32 %s1, 4
  %s14 = int_to_ptr.vmem [resolvable:$true] %s13
  %16 = dma.vmem_to_smem %s14, 16, [#allocation6], [#allocation4]
  %17 = dma.done [#allocation4], 32
  %18 = sfence
  $region1: #{tpu_custom_call.1} parent=0
    #allocation7 [shape = 'u8[49152]{0}', space=vmem, size = 0xc000, scoped, tag = 'input window, operand 2, single buffered']
    #allocation8 [shape = 's32[1]{0}', space=sflag, size = 0x4, scoped, tag = 'scoped memory for tpu_custom_call.1']
    #allocation9 [shape = 's32[1]{0}', space=sflag, size = 0x4, scoped, tag = 'scoped memory for tpu_custom_call.1']
    #allocation10 [shape = 'u8[131072]{0}', space=vmem, size = 0x20000, scoped, tag = 'input window, operand 3, single buffered']
    #allocation11 [shape = 's32[1]{0}', space=sflag, size = 0x4, scoped, tag = 'scoped memory for tpu_custom_call.1']
    #allocation12 [shape = 'u8[131072]{0}', space=vmem, size = 0x20000, scoped, tag = 'input window, operand 4, single buffered']
    #allocation13 [shape = 'u8[32768]{0}', space=vmem, size = 0x8000, scoped, tag = 'input window, operand 5, single buffered']
    #allocation14 [shape = 's32[1]{0}', space=sflag, size = 0x4, scoped, tag = 'scoped memory for tpu_custom_call.1']
    #allocation15 [shape = 'u8[20480]{0}', space=vmem, size = 0x5000, scoped, tag = 'output window, operand 0, single buffered']
    %19 = vsyncpa [#allocation8], 0
    %20 = vsyncpa [#allocation11], 0
    %21 = vsyncpa [#allocation14], 0
    %22 = vsyncpa [#allocation9], 0
    // Predicated region
    $region2: #{tpu_custom_call.1} parent=1 // pred_check
      _
    $region3: #{tpu_custom_call.1} parent=1 // pred_check_branch
      %24 = sbr.rel (0) target = $region5
    $region4: #{tpu_custom_call.1} parent=1 // pred_region
      %s26 = ssub.s32 1536, 1536
      %27 = vsyncadd [#allocation8], %s26
      %s28 = sshll.u32 [#allocation7], 4
      %s29 = int_to_ptr.vmem [resolvable:$true] %s28
      %34 = dma.hbm_to_vmem [thread:$0]  %s2, 1536, %s29, [#allocation8], 384, 384, 24
    $region5: #{tpu_custom_call.1} parent=1 // pred_fallthru
      _
    // Predicated region
    $region6: #{tpu_custom_call.1} parent=1 // pred_check
      _
    $region7: #{tpu_custom_call.1} parent=1 // pred_check_branch
      %36 = sbr.rel (0) target = $region9
    $region8: #{tpu_custom_call.1} parent=1 // pred_region
      %s38 = ssub.s32 4096, 4096
      %39 = vsyncadd [#allocation11], %s38
      %s40 = sshll.u32 [#allocation10], 4
      %s41 = int_to_ptr.vmem [resolvable:$true] %s40
      %46 = dma.hbm_to_vmem [thread:$0]  %s3, 4096, %s41, [#allocation11], 256, 256, 16
    $region9: #{tpu_custom_call.1} parent=1 // pred_fallthru
      _
    // Predicated region
    $region10: #{tpu_custom_call.1} parent=1 // pred_check
      _
    $region11: #{tpu_custom_call.1} parent=1 // pred_check_branch
      %48 = sbr.rel (0) target = $region13
    $region12: #{tpu_custom_call.1} parent=1 // pred_region
      %s50 = ssub.s32 4096, 4096
      %51 = vsyncadd [#allocation11], %s50
      %s52 = sshll.u32 [#allocation12], 4
      %s53 = int_to_ptr.vmem [resolvable:$true] %s52
      %58 = dma.hbm_to_vmem [thread:$0]  %s4, 4096, %s53, [#allocation11], 256, 256, 16
    $region13: #{tpu_custom_call.1} parent=1 // pred_fallthru
      _
    // Predicated region
    $region14: #{tpu_custom_call.1} parent=1 // pred_check
      _
    $region15: #{tpu_custom_call.1} parent=1 // pred_check_branch
      %60 = sbr.rel (0) target = $region17
    $region16: #{tpu_custom_call.1} parent=1 // pred_region
      %s62 = ssub.s32 1024, 1024
      %63 = vsyncadd [#allocation14], %s62
      %s64 = sshll.u32 [#allocation13], 4
      %s65 = int_to_ptr.vmem [resolvable:$true] %s64
      %70 = dma.hbm_to_vmem [thread:$0]  %s5, 1024, %s65, [#allocation14], 64, 64, 4
    $region17: #{tpu_custom_call.1} parent=1 // pred_fallthru
      _
    // Predicated region
    $region18: #{tpu_custom_call.1} parent=1 // pred_check
      _
    $region19: #{tpu_custom_call.1} parent=1 // pred_check_branch
      %72 = sbr.rel (0) target = $region21
    $region20: #{tpu_custom_call.1} parent=1 // pred_region
      %73 = dma.done [#allocation8], 1536
    $region21: #{tpu_custom_call.1} parent=1 // pred_fallthru
      _
    // Predicated region
    $region22: #{tpu_custom_call.1} parent=1 // pred_check
      _
    $region23: #{tpu_custom_call.1} parent=1 // pred_check_branch
      %75 = sbr.rel (0) target = $region25
    $region24: #{tpu_custom_call.1} parent=1 // pred_region
      %76 = dma.done [#allocation11], 4096
    $region25: #{tpu_custom_call.1} parent=1 // pred_fallthru
      _
    // Predicated region
    $region26: #{tpu_custom_call.1} parent=1 // pred_check
      _
    $region27: #{tpu_custom_call.1} parent=1 // pred_check_branch
      %78 = sbr.rel (0) target = $region29
    $region28: #{tpu_custom_call.1} parent=1 // pred_region
      %79 = dma.done [#allocation11], 4096
    $region29: #{tpu_custom_call.1} parent=1 // pred_fallthru
      _
    // Predicated region
    $region30: #{tpu_custom_call.1} parent=1 // pred_check
      _
    $region31: #{tpu_custom_call.1} parent=1 // pred_check_branch
      %81 = sbr.rel (0) target = $region33
    $region32: #{tpu_custom_call.1} parent=1 // pred_region
      %82 = dma.done [#allocation14], 1024
    $region33: #{tpu_custom_call.1} parent=1 // pred_fallthru
      _
    %84 = vst [vmem:[#allocation15 + $0x20] sm:$0x1] 0.0
    %v85 = vld [vmem:[#allocation7] sm:$0xff]
    %v86 = vld [vmem:[#allocation7 + $0x8] sm:$0xff]
    %v87 = vld [vmem:[#allocation7 + $0x10] sm:$0xff]
    %v88 = vxor.u32 %v86, 2147483648
    %v89 = vmul.f32 %v88, 1.442695
    %v90 = vpow.pop %v89
    %v91 = vadd.f32 %v90, 1.0
    %v92 = vrcp.pop %v91
    %v93 = vmul.f32 1.0, %v92
    %v94 = vxor.u32 %v87, 2147483648
    %v95 = vmul.f32 %v94, 1.442695
    %v96 = vpow.pop %v95
    %v97 = vadd.f32 %v96, 1.0
    %v98 = vrcp.pop %v97
    %v99 = vmul.f32 1.0, %v98
    %v100 = vadd.f32 %v93, %v99
    %v101 = vmul.f32 %v100, 0.5
    %v102 = vsub.f32 1.0, %v101
    %v103 = vtanh.pop %v85
    %v104 = vmul.f32 %v102, %v103
    %105 = vst [vmem:[#allocation15] sm:$0xff] %v104
    loop: start=0, step=1, limit=3
    $region34: #{tpu_custom_call.1} parent=1 // loop_pre_header
      _
    $region35: #{tpu_custom_call.1} parent=1 // loop_header
      %s107 = sphi 0, %s111
      %p108 = scmp.ge.s32.totalorder %s107, 3
    $region36: #{tpu_custom_call.1} parent=1 // loop_header_branch
      %110 = sbr.rel (%p108) target = $region40
    $region37: #{tpu_custom_call.1} parent=1 // loop_body
      %s112 = smul.u32 %s107, 8
      %s113 = sadd.s32 %s112, 8
      %s114 = sld [smem:[#allocation5 + %s112]]
      %s115 = sld [smem:[#allocation6 + %s112]]
      %s116 = scalar_lea.vmem [#allocation15], %s114
      %v117 = vld [vmem:[%s116] sm:$0x1]
      %118 = vst [vmem:[#allocation2] sm:$0x1] %v117
      %s119 = scalar_lea.vmem [#allocation15], %s115
      %v120 = vld [vmem:[%s119] sm:$0x1]
      %121 = vst [vmem:[#allocation3] sm:$0x1] %v120
      %s122 = sadd.s32 %s112, 1
      %s123 = sld [smem:[#allocation5 + %s122]]
      %s124 = sld [smem:[#allocation6 + %s122]]
      %s125 = scalar_lea.vmem [#allocation15], %s123
      %v126 = vld [vmem:[%s125] sm:$0x1]
      %127 = vst [vmem:[#allocation2 + $0x1] sm:$0x1] %v126
      %s128 = scalar_lea.vmem [#allocation15], %s124
      %v129 = vld [vmem:[%s128] sm:$0x1]
      %130 = vst [vmem:[#allocation3 + $0x1] sm:$0x1] %v129
      %s131 = sadd.s32 %s112, 2
      %s132 = sld [smem:[#allocation5 + %s131]]
      %s133 = sld [smem:[#allocation6 + %s131]]
      %s134 = scalar_lea.vmem [#allocation15], %s132
      %v135 = vld [vmem:[%s134] sm:$0x1]
      %136 = vst [vmem:[#allocation2 + $0x2] sm:$0x1] %v135
      %s137 = scalar_lea.vmem [#allocation15], %s133
      %v138 = vld [vmem:[%s137] sm:$0x1]
      %139 = vst [vmem:[#allocation3 + $0x2] sm:$0x1] %v138
      %s140 = sadd.s32 %s112, 3
      %s141 = sld [smem:[#allocation5 + %s140]]
      %s142 = sld [smem:[#allocation6 + %s140]]
      %s143 = scalar_lea.vmem [#allocation15], %s141
      %v144 = vld [vmem:[%s143] sm:$0x1]
      %145 = vst [vmem:[#allocation2 + $0x3] sm:$0x1] %v144
      %s146 = scalar_lea.vmem [#allocation15], %s142
      %v147 = vld [vmem:[%s146] sm:$0x1]
      %148 = vst [vmem:[#allocation3 + $0x3] sm:$0x1] %v147
      %s149 = sadd.s32 %s112, 4
      %s150 = sld [smem:[#allocation5 + %s149]]
      %s151 = sld [smem:[#allocation6 + %s149]]
      %s152 = scalar_lea.vmem [#allocation15], %s150
      %v153 = vld [vmem:[%s152] sm:$0x1]
      %154 = vst [vmem:[#allocation2 + $0x4] sm:$0x1] %v153
      %s155 = scalar_lea.vmem [#allocation15], %s151
      %v156 = vld [vmem:[%s155] sm:$0x1]
      %157 = vst [vmem:[#allocation3 + $0x4] sm:$0x1] %v156
      %s158 = sadd.s32 %s112, 5
      %s159 = sld [smem:[#allocation5 + %s158]]
      %s160 = sld [smem:[#allocation6 + %s158]]
      %s161 = scalar_lea.vmem [#allocation15], %s159
      %v162 = vld [vmem:[%s161] sm:$0x1]
      %163 = vst [vmem:[#allocation2 + $0x5] sm:$0x1] %v162
      %s164 = scalar_lea.vmem [#allocation15], %s160
      %v165 = vld [vmem:[%s164] sm:$0x1]
      %166 = vst [vmem:[#allocation3 + $0x5] sm:$0x1] %v165
      %s167 = sadd.s32 %s112, 6
      %s168 = sld [smem:[#allocation5 + %s167]]
      %s169 = sld [smem:[#allocation6 + %s167]]
      %s170 = scalar_lea.vmem [#allocation15], %s168
      %v171 = vld [vmem:[%s170] sm:$0x1]
      %172 = vst [vmem:[#allocation2 + $0x6] sm:$0x1] %v171
      %s173 = scalar_lea.vmem [#allocation15], %s169
      %v174 = vld [vmem:[%s173] sm:$0x1]
      %175 = vst [vmem:[#allocation3 + $0x6] sm:$0x1] %v174
      %s176 = sadd.s32 %s112, 7
      %s177 = sld [smem:[#allocation5 + %s176]]
      %s178 = sld [smem:[#allocation6 + %s176]]
      %s179 = scalar_lea.vmem [#allocation15], %s177
      %v180 = vld [vmem:[%s179] sm:$0x1]
      %181 = vst [vmem:[#allocation2 + $0x7] sm:$0x1] %v180
      %s182 = scalar_lea.vmem [#allocation15], %s178
      %v183 = vld [vmem:[%s182] sm:$0x1]
      %184 = vst [vmem:[#allocation3 + $0x7] sm:$0x1] %v183
      %v185 = vld [vmem:[#allocation2] sm:$0xff]
      %v186 = vld [vmem:[#allocation3] sm:$0xff]
      %s187 = sshra.s32 %s113, 3
      %s188 = sand.u32 %s113, 7
      %s189 = smul.u32 %s187, 3
      %s190 = smul.addr %s189, 8
      %s191 = scalar_lea.vmem [#allocation7], %s190
      %v192 = vld [vmem:[%s191] sm:$0xff]
      %v193 = vld [vmem:[%s191 + $0x8] sm:$0xff]
      %v194 = vld [vmem:[%s191 + $0x10] sm:$0xff]
      %v195 = vpack.c.bf16 %v185, %v185
      %v196 = vld [vmem:[#allocation10] sm:$0xff]
      %v197 = vld [vmem:[#allocation10 + $0x8] sm:$0xff]
      %v198 = vld [vmem:[#allocation10 + $0x10] sm:$0xff]
      %v199 = vld [vmem:[#allocation10 + $0x18] sm:$0xff]
      %v200 = vld [vmem:[#allocation10 + $0x20] sm:$0xff]
      %v201 = vld [vmem:[#allocation10 + $0x28] sm:$0xff]
      %v202 = vld [vmem:[#allocation10 + $0x30] sm:$0xff]
      %v203 = vld [vmem:[#allocation10 + $0x38] sm:$0xff]
      %v204 = vld [vmem:[#allocation10 + $0x40] sm:$0xff]
      %v205 = vld [vmem:[#allocation10 + $0x48] sm:$0xff]
      %v206 = vld [vmem:[#allocation10 + $0x50] sm:$0xff]
      %v207 = vld [vmem:[#allocation10 + $0x58] sm:$0xff]
      %v208 = vld [vmem:[#allocation10 + $0x60] sm:$0xff]
      %v209 = vld [vmem:[#allocation10 + $0x68] sm:$0xff]
      %v210 = vld [vmem:[#allocation10 + $0x70] sm:$0xff]
      %v211 = vld [vmem:[#allocation10 + $0x78] sm:$0xff]
      %v212 = vld [vmem:[#allocation10 + $0x80] sm:$0xff]
      %v213 = vld [vmem:[#allocation10 + $0x88] sm:$0xff]
      %v214 = vld [vmem:[#allocation10 + $0x90] sm:$0xff]
      %v215 = vld [vmem:[#allocation10 + $0x98] sm:$0xff]
      %v216 = vld [vmem:[#allocation10 + $0xa0] sm:$0xff]
      %v217 = vld [vmem:[#allocation10 + $0xa8] sm:$0xff]
      %v218 = vld [vmem:[#allocation10 + $0xb0] sm:$0xff]
      %v219 = vld [vmem:[#allocation10 + $0xb8] sm:$0xff]
      %v220 = vld [vmem:[#allocation10 + $0xc0] sm:$0xff]
      %v221 = vld [vmem:[#allocation10 + $0xc8] sm:$0xff]
      %v222 = vld [vmem:[#allocation10 + $0xd0] sm:$0xff]
      %v223 = vld [vmem:[#allocation10 + $0xd8] sm:$0xff]
      %v224 = vld [vmem:[#allocation10 + $0xe0] sm:$0xff]
      %v225 = vld [vmem:[#allocation10 + $0xe8] sm:$0xff]
      %v226 = vld [vmem:[#allocation10 + $0xf0] sm:$0xff]
      %v227 = vld [vmem:[#allocation10 + $0xf8] sm:$0xff]
      %v228 = vpack.c.bf16 %v186, %v186
      %v229 = vld [vmem:[#allocation12] sm:$0xff]
      %v230 = vld [vmem:[#allocation12 + $0x8] sm:$0xff]
      %v231 = vld [vmem:[#allocation12 + $0x10] sm:$0xff]
      %v232 = vld [vmem:[#allocation12 + $0x18] sm:$0xff]
      %v233 = vld [vmem:[#allocation12 + $0x20] sm:$0xff]
      %v234 = vld [vmem:[#allocation12 + $0x28] sm:$0xff]
      %v235 = vld [vmem:[#allocation12 + $0x30] sm:$0xff]
      %v236 = vld [vmem:[#allocation12 + $0x38] sm:$0xff]
      %v237 = vld [vmem:[#allocation12 + $0x40] sm:$0xff]
      %v238 = vld [vmem:[#allocation12 + $0x48] sm:$0xff]
      %v239 = vld [vmem:[#allocation12 + $0x50] sm:$0xff]
      %v240 = vld [vmem:[#allocation12 + $0x58] sm:$0xff]
      %v241 = vld [vmem:[#allocation12 + $0x60] sm:$0xff]
      %v242 = vld [vmem:[#allocation12 + $0x68] sm:$0xff]
      %v243 = vld [vmem:[#allocation12 + $0x70] sm:$0xff]
      %v244 = vld [vmem:[#allocation12 + $0x78] sm:$0xff]
      %v245 = vld [vmem:[#allocation12 + $0x80] sm:$0xff]
      %v246 = vld [vmem:[#allocation12 + $0x88] sm:$0xff]
      %v247 = vld [vmem:[#allocation12 + $0x90] sm:$0xff]
      %v248 = vld [vmem:[#allocation12 + $0x98] sm:$0xff]
      %v249 = vld [vmem:[#allocation12 + $0xa0] sm:$0xff]
      %v250 = vld [vmem:[#allocation12 + $0xa8] sm:$0xff]
      %v251 = vld [vmem:[#allocation12 + $0xb0] sm:$0xff]
      %v252 = vld [vmem:[#allocation12 + $0xb8] sm:$0xff]
      %v253 = vld [vmem:[#allocation12 + $0xc0] sm:$0xff]
      %v254 = vld [vmem:[#allocation12 + $0xc8] sm:$0xff]
      %v255 = vld [vmem:[#allocation12 + $0xd0] sm:$0xff]
      %v256 = vld [vmem:[#allocation12 + $0xd8] sm:$0xff]
      %v257 = vld [vmem:[#allocation12 + $0xe0] sm:$0xff]
      %v258 = vld [vmem:[#allocation12 + $0xe8] sm:$0xff]
      %v259 = vld [vmem:[#allocation12 + $0xf0] sm:$0xff]
      %v260 = vld [vmem:[#allocation12 + $0xf8] sm:$0xff]
      %v293 = vunpack.c.l.b16 %v229
      %v294 = vunpack.c.h.b16 %v229
      %v295 = vunpack.c.l.b16 %v230
      %v296 = vunpack.c.h.b16 %v230
      %v297 = vunpack.c.l.b16 %v231
      %v298 = vunpack.c.h.b16 %v231
      %v299 = vunpack.c.l.b16 %v232
      %v300 = vunpack.c.h.b16 %v232
      %v301 = vunpack.c.l.b16 %v233
      %v302 = vunpack.c.h.b16 %v233
      %v303 = vunpack.c.l.b16 %v234
      %v304 = vunpack.c.h.b16 %v234
      %v305 = vunpack.c.l.b16 %v235
      %v306 = vunpack.c.h.b16 %v235
      %v307 = vunpack.c.l.b16 %v236
      %v308 = vunpack.c.h.b16 %v236
      %v309 = vunpack.c.l.b16 %v237
      %v310 = vunpack.c.h.b16 %v237
      %v311 = vunpack.c.l.b16 %v238
      %v312 = vunpack.c.h.b16 %v238
      %v313 = vunpack.c.l.b16 %v239
      %v314 = vunpack.c.h.b16 %v239
      %v315 = vunpack.c.l.b16 %v240
      %v316 = vunpack.c.h.b16 %v240
      %v317 = vunpack.c.l.b16 %v241
      %v318 = vunpack.c.h.b16 %v241
      %v319 = vunpack.c.l.b16 %v242
      %v320 = vunpack.c.h.b16 %v242
      %v321 = vunpack.c.l.b16 %v243
      %v322 = vunpack.c.h.b16 %v243
      %v323 = vunpack.c.l.b16 %v244
      %v324 = vunpack.c.h.b16 %v244
      %v325 = vunpack.c.l.b16 %v245
      %v326 = vunpack.c.h.b16 %v245
      %v327 = vunpack.c.l.b16 %v246
      %v328 = vunpack.c.h.b16 %v246
      %v329 = vunpack.c.l.b16 %v247
      %v330 = vunpack.c.h.b16 %v247
      %v331 = vunpack.c.l.b16 %v248
      %v332 = vunpack.c.h.b16 %v248
      %v333 = vunpack.c.l.b16 %v249
      %v334 = vunpack.c.h.b16 %v249
      %v335 = vunpack.c.l.b16 %v250
      %v336 = vunpack.c.h.b16 %v250
      %v337 = vunpack.c.l.b16 %v251
      %v338 = vunpack.c.h.b16 %v251
      %v339 = vunpack.c.l.b16 %v252
      %v340 = vunpack.c.h.b16 %v252
      %v341 = vunpack.c.l.b16 %v253
      %v342 = vunpack.c.h.b16 %v253
      %v343 = vunpack.c.l.b16 %v254
      %v344 = vunpack.c.h.b16 %v254
      %v345 = vunpack.c.l.b16 %v255
      %v346 = vunpack.c.h.b16 %v255
      %v347 = vunpack.c.l.b16 %v256
      %v348 = vunpack.c.h.b16 %v256
      %v349 = vunpack.c.l.b16 %v257
      %v350 = vunpack.c.h.b16 %v257
      %v351 = vunpack.c.l.b16 %v258
      %v352 = vunpack.c.h.b16 %v258
      %v353 = vunpack.c.l.b16 %v259
      %v354 = vunpack.c.h.b16 %v259
      %v355 = vunpack.c.l.b16 %v260
      %v356 = vunpack.c.h.b16 %v260
      %v357 = vpack.c.b16 %v297, %v293
      %v358 = vpack.c.b16 %v298, %v294
      %v359 = vpack.c.b16 %v299, %v295
      %v360 = vpack.c.b16 %v300, %v296
      %v361 = vpack.c.b16 %v305, %v301
      %v362 = vpack.c.b16 %v306, %v302
      %v363 = vpack.c.b16 %v307, %v303
      %v364 = vpack.c.b16 %v308, %v304
      %v365 = vpack.c.b16 %v313, %v309
      %v366 = vpack.c.b16 %v314, %v310
      %v367 = vpack.c.b16 %v315, %v311
      %v368 = vpack.c.b16 %v316, %v312
      %v369 = vpack.c.b16 %v321, %v317
      %v370 = vpack.c.b16 %v322, %v318
      %v371 = vpack.c.b16 %v323, %v319
      %v372 = vpack.c.b16 %v324, %v320
      %v373 = vpack.c.b16 %v329, %v325
      %v374 = vpack.c.b16 %v330, %v326
      %v375 = vpack.c.b16 %v331, %v327
      %v376 = vpack.c.b16 %v332, %v328
      %v377 = vpack.c.b16 %v337, %v333
      %v378 = vpack.c.b16 %v338, %v334
      %v379 = vpack.c.b16 %v339, %v335
      %v380 = vpack.c.b16 %v340, %v336
      %v381 = vpack.c.b16 %v345, %v341
      %v382 = vpack.c.b16 %v346, %v342
      %v383 = vpack.c.b16 %v347, %v343
      %v384 = vpack.c.b16 %v348, %v344
      %v385 = vpack.c.b16 %v353, %v349
      %v386 = vpack.c.b16 %v354, %v350
      %v387 = vpack.c.b16 %v355, %v351
      %v388 = vpack.c.b16 %v356, %v352
      %421 = vmatprep.subr.bf16.mxu0 %v358
      %422 = vmatpush1.bf16.msra.mxu0 %v357
      %423 = vmatprep.subr.bf16.mxu0 %v362
      %424 = vmatpush1.bf16.msra.mxu0 %v361
      %425 = vmatprep.subr.bf16.mxu0 %v366
      %426 = vmatpush1.bf16.msra.mxu0 %v365
      %427 = vmatprep.subr.bf16.mxu0 %v370
      %428 = vmatpush1.bf16.msra.mxu0 %v369
      %429 = vmatprep.subr.bf16.mxu0 %v374
      %430 = vmatpush1.bf16.msra.mxu0 %v373
      %431 = vmatprep.subr.bf16.mxu0 %v378
      %432 = vmatpush1.bf16.msra.mxu0 %v377
      %433 = vmatprep.subr.bf16.mxu0 %v382
      %434 = vmatpush1.bf16.msra.mxu0 %v381
      %435 = vmatprep.subr.bf16.mxu0 %v386
      %436 = vmatpush1.bf16.msra.mxu0 %v385
      %437 = vmatprep.subr.bf16.mxu0 0
      %438 = vmatpush1.bf16.msra.mxu0 0
      %439 = vmatprep.subr.bf16.mxu0 0
      %440 = vmatpush1.bf16.msra.mxu0 0
      %441 = vmatprep.subr.bf16.mxu0 0
      %442 = vmatpush1.bf16.msra.mxu0 0
      %443 = vmatprep.subr.bf16.mxu0 0
      %444 = vmatpush1.bf16.msra.mxu0 0
      %445 = vmatprep.subr.bf16.mxu0 0
      %446 = vmatpush1.bf16.msra.mxu0 0
      %447 = vmatprep.subr.bf16.mxu0 0
      %448 = vmatpush1.bf16.msra.mxu0 0
      %449 = vmatprep.subr.bf16.mxu0 0
      %450 = vmatpush1.bf16.msra.mxu0 0
      %451 = vmatprep.subr.bf16.mxu0 0
      %452 = vmatpush1.bf16.msra.mxu0 0
      %453 = vmatprep.mubr.bf16.mxu0 0
      %454 = vmatmul.mubr.bf16.gmra.mrb[0].mxu0 %v228
      %v455 = vpop.f32.mrb[0].mxu0
      %v456 = vadd.f32 0.0, %v455
      %v457 = vpop.f32.mrb[0].mxu0
      %v458 = vadd.f32 0.0, %v457
      %v459 = vpop.f32.mrb[0].mxu0
      %v460 = vpop.f32.mrb[0].mxu0
      %461 = vdwg.mxu0
      %462 = vmatprep.subr.bf16.mxu0 %v360
      %463 = vmatpush1.bf16.msra.mxu0 %v359
      %464 = vmatprep.subr.bf16.mxu0 %v364
      %465 = vmatpush1.bf16.msra.mxu0 %v363
      %466 = vmatprep.subr.bf16.mxu0 %v368
      %467 = vmatpush1.bf16.msra.mxu0 %v367
      %468 = vmatprep.subr.bf16.mxu0 %v372
      %469 = vmatpush1.bf16.msra.mxu0 %v371
      %470 = vmatprep.subr.bf16.mxu0 %v376
      %471 = vmatpush1.bf16.msra.mxu0 %v375
      %472 = vmatprep.subr.bf16.mxu0 %v380
      %473 = vmatpush1.bf16.msra.mxu0 %v379
      %474 = vmatprep.subr.bf16.mxu0 %v384
      %475 = vmatpush1.bf16.msra.mxu0 %v383
      %476 = vmatprep.subr.bf16.mxu0 %v388
      %477 = vmatpush1.bf16.msra.mxu0 %v387
      %478 = vmatprep.subr.bf16.mxu0 0
      %479 = vmatpush1.bf16.msra.mxu0 0
      %480 = vmatprep.subr.bf16.mxu0 0
      %481 = vmatpush1.bf16.msra.mxu0 0
      %482 = vmatprep.subr.bf16.mxu0 0
      %483 = vmatpush1.bf16.msra.mxu0 0
      %484 = vmatprep.subr.bf16.mxu0 0
      %485 = vmatpush1.bf16.msra.mxu0 0
      %486 = vmatprep.subr.bf16.mxu0 0
      %487 = vmatpush1.bf16.msra.mxu0 0
      %488 = vmatprep.subr.bf16.mxu0 0
      %489 = vmatpush1.bf16.msra.mxu0 0
      %490 = vmatprep.subr.bf16.mxu0 0
      %491 = vmatpush1.bf16.msra.mxu0 0
      %492 = vmatprep.subr.bf16.mxu0 0
      %493 = vmatpush1.bf16.msra.mxu0 0
      %494 = vmatprep.mubr.bf16.mxu0 0
      %495 = vmatmul.mubr.bf16.gmra.mrb[0].mxu0 %v228
      %v496 = vpop.f32.mrb[0].mxu0
      %v497 = vadd.f32 0.0, %v496
      %v498 = vpop.f32.mrb[0].mxu0
      %v499 = vadd.f32 0.0, %v498
      %v500 = vpop.f32.mrb[0].mxu0
      %v501 = vpop.f32.mrb[0].mxu0
      %502 = vdwg.mxu0
      %v535 = vunpack.c.l.b16 %v196
      %v536 = vunpack.c.h.b16 %v196
      %v537 = vunpack.c.l.b16 %v197
      %v538 = vunpack.c.h.b16 %v197
      %v539 = vunpack.c.l.b16 %v198
      %v540 = vunpack.c.h.b16 %v198
      %v541 = vunpack.c.l.b16 %v199
      %v542 = vunpack.c.h.b16 %v199
      %v543 = vunpack.c.l.b16 %v200
      %v544 = vunpack.c.h.b16 %v200
      %v545 = vunpack.c.l.b16 %v201
      %v546 = vunpack.c.h.b16 %v201
      %v547 = vunpack.c.l.b16 %v202
      %v548 = vunpack.c.h.b16 %v202
      %v549 = vunpack.c.l.b16 %v203
      %v550 = vunpack.c.h.b16 %v203
      %v551 = vunpack.c.l.b16 %v204
      %v552 = vunpack.c.h.b16 %v204
      %v553 = vunpack.c.l.b16 %v205
      %v554 = vunpack.c.h.b16 %v205
      %v555 = vunpack.c.l.b16 %v206
      %v556 = vunpack.c.h.b16 %v206
      %v557 = vunpack.c.l.b16 %v207
      %v558 = vunpack.c.h.b16 %v207
      %v559 = vunpack.c.l.b16 %v208
      %v560 = vunpack.c.h.b16 %v208
      %v561 = vunpack.c.l.b16 %v209
      %v562 = vunpack.c.h.b16 %v209
      %v563 = vunpack.c.l.b16 %v210
      %v564 = vunpack.c.h.b16 %v210
      %v565 = vunpack.c.l.b16 %v211
      %v566 = vunpack.c.h.b16 %v211
      %v567 = vunpack.c.l.b16 %v212
      %v568 = vunpack.c.h.b16 %v212
      %v569 = vunpack.c.l.b16 %v213
      %v570 = vunpack.c.h.b16 %v213
      %v571 = vunpack.c.l.b16 %v214
      %v572 = vunpack.c.h.b16 %v214
      %v573 = vunpack.c.l.b16 %v215
      %v574 = vunpack.c.h.b16 %v215
      %v575 = vunpack.c.l.b16 %v216
      %v576 = vunpack.c.h.b16 %v216
      %v577 = vunpack.c.l.b16 %v217
      %v578 = vunpack.c.h.b16 %v217
      %v579 = vunpack.c.l.b16 %v218
      %v580 = vunpack.c.h.b16 %v218
      %v581 = vunpack.c.l.b16 %v219
      %v582 = vunpack.c.h.b16 %v219
      %v583 = vunpack.c.l.b16 %v220
      %v584 = vunpack.c.h.b16 %v220
      %v585 = vunpack.c.l.b16 %v221
      %v586 = vunpack.c.h.b16 %v221
      %v587 = vunpack.c.l.b16 %v222
      %v588 = vunpack.c.h.b16 %v222
      %v589 = vunpack.c.l.b16 %v223
      %v590 = vunpack.c.h.b16 %v223
      %v591 = vunpack.c.l.b16 %v224
      %v592 = vunpack.c.h.b16 %v224
      %v593 = vunpack.c.l.b16 %v225
      %v594 = vunpack.c.h.b16 %v225
      %v595 = vunpack.c.l.b16 %v226
      %v596 = vunpack.c.h.b16 %v226
      %v597 = vunpack.c.l.b16 %v227
      %v598 = vunpack.c.h.b16 %v227
      %v599 = vpack.c.b16 %v539, %v535
      %v600 = vpack.c.b16 %v540, %v536
      %v601 = vpack.c.b16 %v541, %v537
      %v602 = vpack.c.b16 %v542, %v538
      %v603 = vpack.c.b16 %v547, %v543
      %v604 = vpack.c.b16 %v548, %v544
      %v605 = vpack.c.b16 %v549, %v545
      %v606 = vpack.c.b16 %v550, %v546
      %v607 = vpack.c.b16 %v555, %v551
      %v608 = vpack.c.b16 %v556, %v552
      %v609 = vpack.c.b16 %v557, %v553
      %v610 = vpack.c.b16 %v558, %v554
      %v611 = vpack.c.b16 %v563, %v559
      %v612 = vpack.c.b16 %v564, %v560
      %v613 = vpack.c.b16 %v565, %v561
      %v614 = vpack.c.b16 %v566, %v562
      %v615 = vpack.c.b16 %v571, %v567
      %v616 = vpack.c.b16 %v572, %v568
      %v617 = vpack.c.b16 %v573, %v569
      %v618 = vpack.c.b16 %v574, %v570
      %v619 = vpack.c.b16 %v579, %v575
      %v620 = vpack.c.b16 %v580, %v576
      %v621 = vpack.c.b16 %v581, %v577
      %v622 = vpack.c.b16 %v582, %v578
      %v623 = vpack.c.b16 %v587, %v583
      %v624 = vpack.c.b16 %v588, %v584
      %v625 = vpack.c.b16 %v589, %v585
      %v626 = vpack.c.b16 %v590, %v586
      %v627 = vpack.c.b16 %v595, %v591
      %v628 = vpack.c.b16 %v596, %v592
      %v629 = vpack.c.b16 %v597, %v593
      %v630 = vpack.c.b16 %v598, %v594
      %663 = vmatprep.subr.bf16.mxu0 %v600
      %664 = vmatpush1.bf16.msra.mxu0 %v599
      %665 = vmatprep.subr.bf16.mxu0 %v604
      %666 = vmatpush1.bf16.msra.mxu0 %v603
      %667 = vmatprep.subr.bf16.mxu0 %v608
      %668 = vmatpush1.bf16.msra.mxu0 %v607
      %669 = vmatprep.subr.bf16.mxu0 %v612
      %670 = vmatpush1.bf16.msra.mxu0 %v611
      %671 = vmatprep.subr.bf16.mxu0 %v616
      %672 = vmatpush1.bf16.msra.mxu0 %v615
      %673 = vmatprep.subr.bf16.mxu0 %v620
      %674 = vmatpush1.bf16.msra.mxu0 %v619
      %675 = vmatprep.subr.bf16.mxu0 %v624
      %676 = vmatpush1.bf16.msra.mxu0 %v623
      %677 = vmatprep.subr.bf16.mxu0 %v628
      %678 = vmatpush1.bf16.msra.mxu0 %v627
      %679 = vmatprep.subr.bf16.mxu0 0
      %680 = vmatpush1.bf16.msra.mxu0 0
      %681 = vmatprep.subr.bf16.mxu0 0
      %682 = vmatpush1.bf16.msra.mxu0 0
      %683 = vmatprep.subr.bf16.mxu0 0
      %684 = vmatpush1.bf16.msra.mxu0 0
      %685 = vmatprep.subr.bf16.mxu0 0
      %686 = vmatpush1.bf16.msra.mxu0 0
      %687 = vmatprep.subr.bf16.mxu0 0
      %688 = vmatpush1.bf16.msra.mxu0 0
      %689 = vmatprep.subr.bf16.mxu0 0
      %690 = vmatpush1.bf16.msra.mxu0 0
      %691 = vmatprep.subr.bf16.mxu0 0
      %692 = vmatpush1.bf16.msra.mxu0 0
      %693 = vmatprep.subr.bf16.mxu0 0
      %694 = vmatpush1.bf16.msra.mxu0 0
      %695 = vmatprep.mubr.bf16.mxu0 0
      %696 = vmatmul.mubr.bf16.gmra.mrb[0].mxu0 %v195
      %v697 = vpop.f32.mrb[0].mxu0
      %v698 = vadd.f32 %v456, %v697
      %v699 = vpop.f32.mrb[0].mxu0
      %v700 = vadd.f32 %v458, %v699
      %v701 = vpop.f32.mrb[0].mxu0
      %v702 = vpop.f32.mrb[0].mxu0
      %703 = vdwg.mxu0
      %704 = vmatprep.subr.bf16.mxu0 %v602
      %705 = vmatpush1.bf16.msra.mxu0 %v601
      %706 = vmatprep.subr.bf16.mxu0 %v606
      %707 = vmatpush1.bf16.msra.mxu0 %v605
      %708 = vmatprep.subr.bf16.mxu0 %v610
      %709 = vmatpush1.bf16.msra.mxu0 %v609
      %710 = vmatprep.subr.bf16.mxu0 %v614
      %711 = vmatpush1.bf16.msra.mxu0 %v613
      %712 = vmatprep.subr.bf16.mxu0 %v618
      %713 = vmatpush1.bf16.msra.mxu0 %v617
      %714 = vmatprep.subr.bf16.mxu0 %v622
      %715 = vmatpush1.bf16.msra.mxu0 %v621
      %716 = vmatprep.subr.bf16.mxu0 %v626
      %717 = vmatpush1.bf16.msra.mxu0 %v625
      %718 = vmatprep.subr.bf16.mxu0 %v630
      %719 = vmatpush1.bf16.msra.mxu0 %v629
      %720 = vmatprep.subr.bf16.mxu0 0
      %721 = vmatpush1.bf16.msra.mxu0 0
      %722 = vmatprep.subr.bf16.mxu0 0
      %723 = vmatpush1.bf16.msra.mxu0 0
      %724 = vmatprep.subr.bf16.mxu0 0
      %725 = vmatpush1.bf16.msra.mxu0 0
      %726 = vmatprep.subr.bf16.mxu0 0
      %727 = vmatpush1.bf16.msra.mxu0 0
      %728 = vmatprep.subr.bf16.mxu0 0
      %729 = vmatpush1.bf16.msra.mxu0 0
      %730 = vmatprep.subr.bf16.mxu0 0
      %731 = vmatpush1.bf16.msra.mxu0 0
      %732 = vmatprep.subr.bf16.mxu0 0
      %733 = vmatpush1.bf16.msra.mxu0 0
      %734 = vmatprep.subr.bf16.mxu0 0
      %735 = vmatpush1.bf16.msra.mxu0 0
      %736 = vmatprep.mubr.bf16.mxu0 0
      %737 = vmatmul.mubr.bf16.gmra.mrb[0].mxu0 %v195
      %v738 = vpop.f32.mrb[0].mxu0
      %v739 = vadd.f32 %v497, %v738
      %v740 = vpop.f32.mrb[0].mxu0
      %v741 = vadd.f32 %v499, %v740
      %v742 = vpop.f32.mrb[0].mxu0
      %v743 = vpop.f32.mrb[0].mxu0
      %744 = vdwg.mxu0
      %v745 = vadd.f32 %v193, %v698
      %v746 = vxor.u32 %v745, 2147483648
      %v747 = vmul.f32 %v746, 1.442695
      %v748 = vpow.pop %v747
      %v749 = vadd.f32 %v748, 1.0
      %v750 = vrcp.pop %v749
      %v751 = vmul.f32 1.0, %v750
      %v752 = vadd.f32 %v194, %v700
      %v753 = vxor.u32 %v752, 2147483648
      %v754 = vmul.f32 %v753, 1.442695
      %v755 = vpow.pop %v754
      %v756 = vadd.f32 %v755, 1.0
      %v757 = vrcp.pop %v756
      %v758 = vmul.f32 1.0, %v757
      %v759 = vadd.f32 %v193, %v739
      %v760 = vxor.u32 %v759, 2147483648
      %v761 = vmul.f32 %v760, 1.442695
      %v762 = vpow.pop %v761
      %v763 = vadd.f32 %v762, 1.0
      %v764 = vrcp.pop %v763
      %v765 = vmul.f32 1.0, %v764
      %v766 = vadd.f32 %v194, %v741
      %v767 = vxor.u32 %v766, 2147483648
      %v768 = vmul.f32 %v767, 1.442695
      %v769 = vpow.pop %v768
      %v770 = vadd.f32 %v769, 1.0
      %v771 = vrcp.pop %v770
      %v772 = vmul.f32 1.0, %v771
      %v773 = vmul.f32 %v751, %v185
      %v774 = vmul.f32 %v758, %v186
      %v775 = vadd.f32 %v773, %v774
      %v776 = vpack.c.bf16 %v775, %v775
      %v777 = vld [vmem:[#allocation13] sm:$0xf]
      %v778 = vld [vmem:[#allocation13 + $0x4] sm:$0xf]
      %v779 = vld [vmem:[#allocation13 + $0x8] sm:$0xf]
      %v780 = vld [vmem:[#allocation13 + $0xc] sm:$0xf]
      %v781 = vld [vmem:[#allocation13 + $0x10] sm:$0xf]
      %v782 = vld [vmem:[#allocation13 + $0x14] sm:$0xf]
      %v783 = vld [vmem:[#allocation13 + $0x18] sm:$0xf]
      %v784 = vld [vmem:[#allocation13 + $0x1c] sm:$0xf]
      %v785 = vld [vmem:[#allocation13 + $0x20] sm:$0xf]
      %v786 = vld [vmem:[#allocation13 + $0x24] sm:$0xf]
      %v787 = vld [vmem:[#allocation13 + $0x28] sm:$0xf]
      %v788 = vld [vmem:[#allocation13 + $0x2c] sm:$0xf]
      %v789 = vld [vmem:[#allocation13 + $0x30] sm:$0xf]
      %v790 = vld [vmem:[#allocation13 + $0x34] sm:$0xf]
      %v791 = vld [vmem:[#allocation13 + $0x38] sm:$0xf]
      %v792 = vld [vmem:[#allocation13 + $0x3c] sm:$0xf]
      %v809 = vunpack.c.l.b16 %v777
      %v810 = vunpack.c.l.b16 %v778
      %v811 = vunpack.c.l.b16 %v779
      %v812 = vunpack.c.l.b16 %v780
      %v813 = vunpack.c.l.b16 %v781
      %v814 = vunpack.c.l.b16 %v782
      %v815 = vunpack.c.l.b16 %v783
      %v816 = vunpack.c.l.b16 %v784
      %v817 = vunpack.c.l.b16 %v785
      %v818 = vunpack.c.l.b16 %v786
      %v819 = vunpack.c.l.b16 %v787
      %v820 = vunpack.c.l.b16 %v788
      %v821 = vunpack.c.l.b16 %v789
      %v822 = vunpack.c.l.b16 %v790
      %v823 = vunpack.c.l.b16 %v791
      %v824 = vunpack.c.l.b16 %v792
      %v825 = vpack.c.b16 %v810, %v809
      %v826 = vpack.c.b16 %v812, %v811
      %v827 = vpack.c.b16 %v814, %v813
      %v828 = vpack.c.b16 %v816, %v815
      %v829 = vpack.c.b16 %v818, %v817
      %v830 = vpack.c.b16 %v820, %v819
      %v831 = vpack.c.b16 %v822, %v821
      %v832 = vpack.c.b16 %v824, %v823
      %841 = vmatprep.subr.bf16.mxu0 0
      %842 = vmatpush1.bf16.msra.mxu0 %v825
      %843 = vmatprep.subr.bf16.mxu0 0
      %844 = vmatpush1.bf16.msra.mxu0 %v826
      %845 = vmatprep.subr.bf16.mxu0 0
      %846 = vmatpush1.bf16.msra.mxu0 %v827
      %847 = vmatprep.subr.bf16.mxu0 0
      %848 = vmatpush1.bf16.msra.mxu0 %v828
      %849 = vmatprep.subr.bf16.mxu0 0
      %850 = vmatpush1.bf16.msra.mxu0 %v829
      %851 = vmatprep.subr.bf16.mxu0 0
      %852 = vmatpush1.bf16.msra.mxu0 %v830
      %853 = vmatprep.subr.bf16.mxu0 0
      %854 = vmatpush1.bf16.msra.mxu0 %v831
      %855 = vmatprep.subr.bf16.mxu0 0
      %856 = vmatpush1.bf16.msra.mxu0 %v832
      %857 = vmatprep.subr.bf16.mxu0 0
      %858 = vmatpush1.bf16.msra.mxu0 0
      %859 = vmatprep.subr.bf16.mxu0 0
      %860 = vmatpush1.bf16.msra.mxu0 0
      %861 = vmatprep.subr.bf16.mxu0 0
      %862 = vmatpush1.bf16.msra.mxu0 0
      %863 = vmatprep.subr.bf16.mxu0 0
      %864 = vmatpush1.bf16.msra.mxu0 0
      %865 = vmatprep.subr.bf16.mxu0 0
      %866 = vmatpush1.bf16.msra.mxu0 0
      %867 = vmatprep.subr.bf16.mxu0 0
      %868 = vmatpush1.bf16.msra.mxu0 0
      %869 = vmatprep.subr.bf16.mxu0 0
      %870 = vmatpush1.bf16.msra.mxu0 0
      %871 = vmatprep.subr.bf16.mxu0 0
      %872 = vmatpush1.bf16.msra.mxu0 0
      %873 = vmatprep.mubr.bf16.mxu0 0
      %874 = vmatmul.mubr.bf16.gmra.mrb[0].mxu0 %v776
      %v875 = vpop.f32.mrb[0].mxu0
      %v876 = vadd.f32 0.0, %v875
      %v877 = vpop.f32.mrb[0].mxu0
      %v878 = vpop.f32.mrb[0].mxu0
      %v879 = vpop.f32.mrb[0].mxu0
      %880 = vdwg.mxu0
      %v881 = vadd.f32 %v192, %v876
      %v882 = vtanh.pop %v881
      %v883 = vmul.f32 %v765, %v185
      %v884 = vmul.f32 %v772, %v186
      %v885 = vadd.f32 %v883, %v884
      %v886 = vadd.f32 %v765, %v772
      %v887 = vmul.f32 %v886, 0.5
      %v888 = vsub.f32 1.0, %v887
      %v889 = vmul.f32 %v888, %v882
      %v890 = vadd.f32 %v885, %v889
      %s891 = scalar_lea.vmem [#allocation15], %s113
      %892 = vst [vmem:[%s891] sm:$0xff] %v890
    $region38: #{tpu_custom_call.1} parent=1 // loop_footer
      %s111 = sadd.s32 1, %s107
    $region39: #{tpu_custom_call.1} parent=1 // loop_footer_branch
      %106 = sbr.rel target = $region35
    $region40: #{tpu_custom_call.1} parent=1 // loop_exit
      _
    // Predicated region
    $region41: #{tpu_custom_call.1} parent=1 // pred_check
      _
    $region42: #{tpu_custom_call.1} parent=1 // pred_check_branch
      %894 = sbr.rel (0) target = $region44
    $region43: #{tpu_custom_call.1} parent=1 // pred_region
      %s896 = ssub.s32 640, 640
      %897 = vsyncadd [#allocation9], %s896
      %s898 = sshll.u32 [#allocation15], 4
      %s899 = int_to_ptr.vmem [resolvable:$true] %s898
      %904 = dma.vmem_to_hbm [thread:$0]  %s899, 640, %s6, [#allocation9], 128, 128, 8
    $region44: #{tpu_custom_call.1} parent=1 // pred_fallthru
      _
    // Predicated region
    $region45: #{tpu_custom_call.1} parent=1 // pred_check
      _
    $region46: #{tpu_custom_call.1} parent=1 // pred_check_branch
      %906 = sbr.rel (0) target = $region48
    $region47: #{tpu_custom_call.1} parent=1 // pred_region
      %907 = dma.done [#allocation9], 640
    $region48: #{tpu_custom_call.1} parent=1 // pred_fallthru
      _
    %908 = vsyncpa [#allocation8], 1
    %909 = vsyncpa [#allocation11], 1
    %910 = vsyncpa [#allocation14], 1
    %911 = vsyncpa [#allocation9], 1

</llo_original>
